<compile_context>
chip_gen: v5e
topology: v5e:2x2
jax: 0.10.0
libtpu: 0.0.40
codegen_flags: <defaults>
</compile_context>

<pallas_src>
import math

import jax
import jax.numpy as jnp
from jax.experimental import pallas as pl
from jax.experimental.pallas import tpu as pltpu

NUM_FEATURES = 56          # len(full_atom_feature_dims)
NUM_CATEGORIES = 2         # full_atom_feature_dims[i] == 2 for all i
EMB_DIM = 32               # small emb_dim for the example
N_NODES = 300              # small batch of atoms (exercises the ragged last block)


def atom_encoder_kernel(x_ref, delta_ref, base_ref, o_ref):
    # x_ref     : [block_n, F] int8  node-major features (values in {0, 1})
    # delta_ref : [F, E]       f32   W[1] - W[0]          (VMEM-resident)
    # base_ref  : [1, E]       f32   sum_f W[0, f, :]     (VMEM-resident)
    # o_ref     : [block_n, E] f32   node-major output tile
    x = x_ref[...].astype(jnp.float32)   # int8 {0,1} -> f32, exact
    o_ref[...] = (
        jnp.dot(x, delta_ref[...], preferred_element_type=jnp.float32)
        + base_ref[...]
    )


def atom_encoder(x, weights, *, max_block_n=8192):
    """x: [N, F] int (values in {0,1}), weights: [C, F, E] f32 -> [N, E] f32."""
    n, f = x.shape
    c, f2, e = weights.shape
    assert f == f2 == NUM_FEATURES and c == NUM_CATEGORIES

    # Affine reformulation of the 2-row embedding-table sum.  In production
    # these two tiny tensors would be precomputed once, not per call.
    delta = weights[1] - weights[0]               # [F, E]
    base = jnp.sum(weights[0], axis=0)[None, :]   # [1, E]

    # int8 input: 4x less HBM traffic than int32.  (No transpose, no pad.)
    x8 = x if x.dtype == jnp.int8 else x.astype(jnp.int8)

    # Tile the node axis: as large as possible (amortize per-step overhead),
    # but ensure >= 2 grid steps so both v7x TensorCores get work.
    half = ((pl.cdiv(n, 2) + 127) // 128) * 128
    block_n = max(128, min(max_block_n, half))
    grid = (pl.cdiv(n, block_n),)

    cost = pl.CostEstimate(
        flops=2 * n * f * e + n * e,
        transcendentals=0,
        bytes_accessed=n * f * 1 + f * e * 4 + e * 4 + n * e * 4,
    )

    return pl.pallas_call(
        atom_encoder_kernel,
        out_shape=jax.ShapeDtypeStruct((n, e), jnp.float32),
        grid=grid,
        in_specs=[
            pl.BlockSpec((block_n, f), lambda i: (i, 0)),   # node tile of x (int8)
            pl.BlockSpec((f, e), lambda i: (0, 0)),         # delta (resident)
            pl.BlockSpec((1, e), lambda i: (0, 0)),         # base  (resident)
        ],
        out_specs=pl.BlockSpec((block_n, e), lambda i: (i, 0)),
        compiler_params=pltpu.CompilerParams(
            dimension_semantics=("parallel",),
        ),
        cost_estimate=cost,
    )(x8, delta, base)


def init_params(key, emb_dim):
    """Deterministic xavier_uniform init for 56 Embedding(2, emb_dim) tables."""
    bound = math.sqrt(6.0 / (NUM_CATEGORIES + emb_dim))
    keys = jax.random.split(key, NUM_FEATURES)
    tables = [
        jax.random.uniform(
            keys[i], (NUM_CATEGORIES, emb_dim), jnp.float32, -bound, bound
        )
        for i in range(NUM_FEATURES)
    ]
    w = jnp.stack(tables, axis=0)          # [F, C, E]
    return jnp.transpose(w, (1, 0, 2))     # [C, F, E]


def reference(x, weights):
    # Pure-JAX reference: sum_f weights[x[:, f], f, :] (gather form, like PyTorch).
    out = jnp.zeros((x.shape[0], weights.shape[-1]), jnp.float32)
    for fi in range(x.shape[1]):
        out = out + weights[x[:, fi], fi, :]
    return out


if __name__ == "__main__":
    key = jax.random.PRNGKey(0)
    k_w, k_x = jax.random.split(key)
    weights = init_params(k_w, EMB_DIM)                               # [2, 56, 32]
    x = jax.random.randint(
        k_x, (N_NODES, NUM_FEATURES), 0, NUM_CATEGORIES, dtype=jnp.int32
    ).astype(jnp.int8)                                                # [300, 56]

    # N=300 -> block_n=256, grid=(2,): exercises both the ragged last block
    # and a multi-step "parallel" grid.
    out = jax.block_until_ready(atom_encoder(x, weights))

    ref = reference(x, weights)
    assert out.shape == (N_NODES, EMB_DIM)
    assert jnp.allclose(out, ref, atol=1e-4, rtol=1e-4), float(
        jnp.max(jnp.abs(out - ref))
    )
    print("KERNEL_OK")
</pallas_src>

<mosaic_0001>
module attributes {stable_mosaic.version = 11 : i64} {
  func.func @atom_encoder_kernel(%arg0: i32, %arg1: memref<256x56xi8, #tpu.memory_space<vmem>>, %arg2: memref<56x32xf32, #tpu.memory_space<vmem>>, %arg3: memref<1x32xf32, #tpu.memory_space<vmem>>, %arg4: memref<256x32xf32, #tpu.memory_space<vmem>>) attributes {dimension_semantics = [#tpu.dimension_semantics<parallel>], iteration_bounds = array<i64: 2>, scalar_prefetch = 0 : i64, scratch_operands = 0 : i64, tpu.core_type = #tpu.core_type<tc>, window_params = [{transform_indices = @transform_0, window_bounds = array<i64: 256, 56>}, {pipeline_mode = #tpu.pipeline_mode<synchronous>, transform_indices = @transform_1, window_bounds = array<i64: 56, 32>}, {pipeline_mode = #tpu.pipeline_mode<synchronous>, transform_indices = @transform_2, window_bounds = array<i64: 1, 32>}, {transform_indices = @transform_3, window_bounds = array<i64: 256, 32>}]} {
    %c0 = arith.constant 0 : index
    %c0_0 = arith.constant 0 : index
    %0 = vector.load %arg1[%c0, %c0_0] : memref<256x56xi8, #tpu.memory_space<vmem>>, vector<256x56xi8>
    %1 = arith.sitofp %0 : vector<256x56xi8> to vector<256x56xf32>
    %c0_1 = arith.constant 0 : index
    %c0_2 = arith.constant 0 : index
    %2 = vector.load %arg2[%c0_1, %c0_2] : memref<56x32xf32, #tpu.memory_space<vmem>>, vector<56x32xf32>
    %cst = arith.constant dense<0.000000e+00> : vector<256x32xf32>
    %3 = tpu.matmul %1, %2, %cst {dimension_numbers = #tpu.dot_dimension_numbers<[1], [0], [0], [1], [0, 0, 1, 1], [], []>} : vector<256x56xf32>, vector<56x32xf32>, vector<256x32xf32> -> vector<256x32xf32>
    %c0_3 = arith.constant 0 : index
    %c0_4 = arith.constant 0 : index
    %4 = vector.load %arg3[%c0_3, %c0_4] : memref<1x32xf32, #tpu.memory_space<vmem>>, vector<1x32xf32>
    %5 = vector.broadcast %4 : vector<1x32xf32> to vector<256x32xf32>
    %6 = arith.addf %3, %5 : vector<256x32xf32>
    %c0_5 = arith.constant 0 : index
    %c0_6 = arith.constant 0 : index
    %7 = vector.load %arg4[%c0_5, %c0_6] : memref<256x32xf32, #tpu.memory_space<vmem>>, vector<256x32xf32>
    tpu.vector_store %arg4[%c0_5, %c0_6], %6 {strides = array<i32>} : memref<256x32xf32, #tpu.memory_space<vmem>>, vector<256x32xf32>,
    return
  }
  func.func @transform_0(%arg0: i32) -> (i32, i32) {
    %c0_i32 = arith.constant 0 : i32
    %c0_i32_0 = arith.constant 0 : i32
    return %arg0, %c0_i32 : i32, i32
  }
  func.func @transform_1(%arg0: i32) -> (i32, i32) {
    %c0_i32 = arith.constant 0 : i32
    %c0_i32_0 = arith.constant 0 : i32
    %c0_i32_1 = arith.constant 0 : i32
    return %c0_i32, %c0_i32_0 : i32, i32
  }
  func.func @transform_2(%arg0: i32) -> (i32, i32) {
    %c0_i32 = arith.constant 0 : i32
    %c0_i32_0 = arith.constant 0 : i32
    %c0_i32_1 = arith.constant 0 : i32
    return %c0_i32, %c0_i32_0 : i32, i32
  }
  func.func @transform_3(%arg0: i32) -> (i32, i32) {
    %c0_i32 = arith.constant 0 : i32
    %c0_i32_0 = arith.constant 0 : i32
    return %arg0, %c0_i32 : i32, i32
  }
}

</mosaic_0001>

<llo_original>
// kernel: tpu_custom_call.1
$region0: #{tpu_custom_call.1}
  #allocation0 [shape = 'u32[]', space=smem, size = 0x4, offset = 0x4, fixed_abs, tag = 'smem constant byte address 0x4 - core index']
  #allocation1 [shape = 'u32[72,128]{1,0:T(1,128)}', space=vmem, size = 0x9000, scoped, tag = 'internal scratch']
  %s0 = inlined_call_operand.vmem [shape: s8[300,56], index: 0, kind: input, shape index: {}]
  %s1 = inlined_call_operand.vmem [shape: f32[56,32], index: 1, kind: input, shape index: {}]
  %s2 = inlined_call_operand.vmem [shape: f32[1,32], index: 2, kind: input, shape index: {}]
  %s3 = inlined_call_operand.vmem [shape: f32[300,32], index: 3, kind: output, shape index: {}]
  %s4 = sld [smem:[#allocation0]]
  $region93: #{tpu_custom_call.1} parent=0
    _
  %s6 = ssub.s32 1, %s4
  %s7 = scalar_select 0, %s6, %s4
  $region1: #{tpu_custom_call.1} parent=0
    #allocation2 [shape = 'u8[262144]{0}', space=vmem, size = 0x40000, scoped, tag = 'output window, operand 0']
    loop: start=0, step=1, limit=4
    $region2: #{tpu_custom_call.1} parent=1 // loop_pre_header
      _
    $region3: #{tpu_custom_call.1} parent=1 // loop_header
      %s9 = sphi 0, %s13
      %p10 = scmp.ge.s32.totalorder %s9, 4
      %s19 = sphi 0, %s21
      %s22 = sphi 0, %s19
      %s23 = sphi 0, %s22
      %s39 = sphi 0, %s23
      %s43 = sphi 0, %s43
      %s45 = sphi 0, %s43
      %s46 = sphi 0, %s45
      %s60 = sphi 0, %s46
      %s64 = sphi 0, %s64
      %s66 = sphi 0, %s64
      %s67 = sphi 0, %s66
      %s81 = sphi 0, %s67
      %s87 = sphi 0, %s89
      %s90 = sphi 0, %s87
      %s91 = sphi 0, %s90
      %s107 = sphi 0, %s91
    $region4: #{tpu_custom_call.1} parent=1 // loop_header_branch
      %12 = sbr.rel (%p10) target = $region8
    $region5: #{tpu_custom_call.1} parent=1 // loop_body
      %s14 = ssub.s32 %s9, 1
      %s15 = ssub.s32 %s9, 2
      %s16 = sadd.s32 %s9, 1
      %s17 = ssub.s32 %s9, %s16
      %p18 = scmp.eq.s32.totalorder %s17, 0
      %s20 = sadd.s32 %s19, 1
      %s21 = scalar_select %p18, %s19, %s20
      %p24 = pneg %p18
      %p25 = scmp.eq.s32.totalorder %s9, 1
      %p26 = por %p24, %p25
      %p27 = scmp.ne.s32.totalorder %s19, %s22
      %p28 = scmp.eq.s32.totalorder %s9, 0
      %p29 = por %p27, %p28
      %p30 = scmp.ne.s32.totalorder %s19, %s22
      %p31 = scmp.eq.s32.totalorder %s14, 1
      %p32 = por %p30, %p31
      %p33 = scmp.ne.s32.totalorder %s22, %s23
      %p34 = scmp.eq.s32.totalorder %s14, 0
      %p35 = por %p33, %p34
      %p36 = scmp.ne.s32.totalorder %s22, %s23
      %p37 = scmp.eq.s32.totalorder %s15, 1
      %p38 = por %p36, %p37
      %p40 = scmp.ne.s32.totalorder %s23, %s39
      %p41 = scmp.eq.s32.totalorder %s15, 0
      %p42 = por %p40, %p41
      %s44 = sadd.s32 %s43, 1
      %p47 = scmp.eq.s32.totalorder %s9, 1
      %p48 = scmp.ne.s32.totalorder %s43, %s45
      %p49 = scmp.eq.s32.totalorder %s9, 0
      %p50 = por %p48, %p49
      %p51 = scmp.ne.s32.totalorder %s43, %s45
      %p52 = scmp.eq.s32.totalorder %s14, 1
      %p53 = por %p51, %p52
      %p54 = scmp.ne.s32.totalorder %s45, %s46
      %p55 = scmp.eq.s32.totalorder %s14, 0
      %p56 = por %p54, %p55
      %p57 = scmp.ne.s32.totalorder %s45, %s46
      %p58 = scmp.eq.s32.totalorder %s15, 1
      %p59 = por %p57, %p58
      %p61 = scmp.ne.s32.totalorder %s46, %s60
      %p62 = scmp.eq.s32.totalorder %s15, 0
      %p63 = por %p61, %p62
      %s65 = sadd.s32 %s64, 1
      %p68 = scmp.eq.s32.totalorder %s9, 1
      %p69 = scmp.ne.s32.totalorder %s64, %s66
      %p70 = scmp.eq.s32.totalorder %s9, 0
      %p71 = por %p69, %p70
      %p72 = scmp.ne.s32.totalorder %s64, %s66
      %p73 = scmp.eq.s32.totalorder %s14, 1
      %p74 = por %p72, %p73
      %p75 = scmp.ne.s32.totalorder %s66, %s67
      %p76 = scmp.eq.s32.totalorder %s14, 0
      %p77 = por %p75, %p76
      %p78 = scmp.ne.s32.totalorder %s66, %s67
      %p79 = scmp.eq.s32.totalorder %s15, 1
      %p80 = por %p78, %p79
      %p82 = scmp.ne.s32.totalorder %s67, %s81
      %p83 = scmp.eq.s32.totalorder %s15, 0
      %p84 = por %p82, %p83
      %s85 = ssub.s32 %s9, %s16
      %p86 = scmp.eq.s32.totalorder %s85, 0
      %s88 = sadd.s32 %s87, 1
      %s89 = scalar_select %p86, %s87, %s88
      %p92 = pneg %p86
      %p93 = scmp.eq.s32.totalorder %s9, 1
      %p94 = por %p92, %p93
      %p95 = scmp.ne.s32.totalorder %s87, %s90
      %p96 = scmp.eq.s32.totalorder %s9, 0
      %p97 = por %p95, %p96
      %p98 = scmp.ne.s32.totalorder %s87, %s90
      %p99 = scmp.eq.s32.totalorder %s14, 1
      %p100 = por %p98, %p99
      %p101 = scmp.ne.s32.totalorder %s90, %s91
      %p102 = scmp.eq.s32.totalorder %s14, 0
      %p103 = por %p101, %p102
      %p104 = scmp.ne.s32.totalorder %s90, %s91
      %p105 = scmp.eq.s32.totalorder %s15, 1
      %p106 = por %p104, %p105
      %p108 = scmp.ne.s32.totalorder %s91, %s107
      %p109 = scmp.eq.s32.totalorder %s15, 0
      %p110 = por %p108, %p109
      %p111 = scmp.le.s32.totalorder 1, %s9
      %p112 = scmp.lt.s32.totalorder %s9, 3
      %p113 = pnand %p111, %p112
      %p114 = pneg %p113
      // Predicated region
      $region9: #{tpu_custom_call.1} parent=5 // pred_check
        _
      $region10: #{tpu_custom_call.1} parent=5 // pred_check_branch
        %116 = sbr.rel (%p113) target = $region12
      $region11: #{tpu_custom_call.1} parent=5 // pred_region
        %s117 = ssub.s32 %s9, 1
        // Predicated region
        $region13: #{tpu_custom_call.1} parent=11 // pred_check
          %p118 = pneg %p56
        $region14: #{tpu_custom_call.1} parent=11 // pred_check_branch
          %120 = sbr.rel (%p118) target = $region16
        $region15: #{tpu_custom_call.1} parent=11 // pred_region
          _
        $region16: #{tpu_custom_call.1} parent=11 // pred_fallthru
          _
        // Predicated region
        $region17: #{tpu_custom_call.1} parent=11 // pred_check
          %p121 = pneg %p77
        $region18: #{tpu_custom_call.1} parent=11 // pred_check_branch
          %123 = sbr.rel (%p121) target = $region20
        $region19: #{tpu_custom_call.1} parent=11 // pred_region
          _
        $region20: #{tpu_custom_call.1} parent=11 // pred_fallthru
          _
      $region12: #{tpu_custom_call.1} parent=5 // pred_fallthru
        _
      %p124 = scmp.lt.s32.totalorder %s9, 2
      // Predicated region
      $region21: #{tpu_custom_call.1} parent=5 // pred_check
        %p125 = pneg %p124
      $region22: #{tpu_custom_call.1} parent=5 // pred_check_branch
        %127 = sbr.rel (%p125) target = $region24
      $region23: #{tpu_custom_call.1} parent=5 // pred_region
        // Predicated region
        $region25: #{tpu_custom_call.1} parent=23 // pred_check
          %p128 = pneg %p29
        $region26: #{tpu_custom_call.1} parent=23 // pred_check_branch
          %130 = sbr.rel (%p128) target = $region28
        $region27: #{tpu_custom_call.1} parent=23 // pred_region
          %s131 = smul.u32 32, %s9
          %s132 = ssub.s32 38, %s131
          %p133 = scmp.lt.s32.totalorder %s132, 32
          %s134 = scalar_select %p133, %s132, 32
          %s135 = smul.u32 2, %s134
          %p136 = scmp.lt.s32.totalorder %s131, 37
          %s137 = scalar_select %p136, %s131, 37
          %s138 = smul.addr %s137, 2
          %s139 = scalar_lea.vmem %s0, %s138
          %s140 = smul.u32 32, %s9
          %s141 = ssub.s32 38, %s140
          %p142 = scmp.lt.s32.totalorder %s141, 32
          %s143 = scalar_select %p142, %s141, 32
          %s144 = smul.u32 2, %s143
        $region28: #{tpu_custom_call.1} parent=23 // pred_fallthru
          _
      $region24: #{tpu_custom_call.1} parent=5 // pred_fallthru
        _
      %p145 = scmp.le.s32.totalorder 1, %s9
      %p146 = scmp.lt.s32.totalorder %s9, 3
      %p147 = pnand %p145, %p146
      %p148 = pneg %p147
      // Predicated region
      $region29: #{tpu_custom_call.1} parent=5 // pred_check
        _
      $region30: #{tpu_custom_call.1} parent=5 // pred_check_branch
        %150 = sbr.rel (%p147) target = $region32
      $region31: #{tpu_custom_call.1} parent=5 // pred_region
        %s151 = ssub.s32 %s9, 1
        %s152 = smul.u32 32, %s14
        %s153 = ssub.s32 38, %s152
        %p154 = scmp.lt.s32.totalorder %s153, 32
        %s155 = scalar_select %p154, %s153, 32
        %s156 = smul.u32 2, %s155
        %p157 = scmp.lt.s32.totalorder %s152, 37
        %s158 = scalar_select %p157, %s152, 37
        %s159 = smul.addr %s158, 2
        %s160 = scalar_lea.vmem %s0, %s159
        %p161 = pneg %p35
        %p162 = pneg %p32
        %p163 = pneg %p56
        %p164 = pneg %p53
        %p165 = pneg %p77
        %p166 = pneg %p74
        %p167 = pneg %p103
        %p168 = pneg %p100
        %s169 = sand.u32 %s90, 1
        %s170 = sand.u32 %s90, 1
        %s171 = smul.addr %s170, 256
        %s172 = scalar_lea.vmem [#allocation2], %s171
        %s173 = smul.u32 32, %s14
        %s174 = ssub.s32 38, %s173
        %p175 = scmp.lt.s32.totalorder %s174, 32
        %s176 = scalar_select %p175, %s174, 32
        %s177 = smul.u32 2, %s176
        %p178 = scmp.lt.s32.totalorder %s173, 37
        %s179 = scalar_select %p178, %s173, 37
        %s180 = smul.addr %s179, 2
        %s181 = scalar_lea.vmem %s0, %s180
        %s182 = smul.u32 32, %s14
        %s183 = ssub.s32 38, %s182
        %p184 = scmp.lt.s32.totalorder %s183, 32
        %s185 = scalar_select %p184, %s183, 32
        %s186 = smul.u32 2, %s185
        %s187 = smul.u32 32, %s14
        %s188 = ssub.s32 38, %s187
        %p189 = scmp.lt.s32.totalorder %s188, 32
        %s190 = scalar_select %p189, %s188, 32
        %s191 = smul.u32 8, %s190
        %v192 = vld [vmem:[%s181] sm:$0x3]
        %v193 = vld [vmem:[%s181 + $0x2] sm:$0x3]
        %v194 = vld [vmem:[%s181 + $0x4] sm:$0x3]
        %v195 = vld [vmem:[%s181 + $0x6] sm:$0x3]
        %v196 = vld [vmem:[%s181 + $0x8] sm:$0x3]
        %v197 = vld [vmem:[%s181 + $0xa] sm:$0x3]
        %v198 = vld [vmem:[%s181 + $0xc] sm:$0x3]
        %v199 = vld [vmem:[%s181 + $0xe] sm:$0x3]
        %v200 = vld [vmem:[%s181 + $0x10] sm:$0x3]
        %v201 = vld [vmem:[%s181 + $0x12] sm:$0x3]
        %v202 = vld [vmem:[%s181 + $0x14] sm:$0x3]
        %v203 = vld [vmem:[%s181 + $0x16] sm:$0x3]
        %v204 = vld [vmem:[%s181 + $0x18] sm:$0x3]
        %v205 = vld [vmem:[%s181 + $0x1a] sm:$0x3]
        %v206 = vld [vmem:[%s181 + $0x1c] sm:$0x3]
        %v207 = vld [vmem:[%s181 + $0x1e] sm:$0x3]
        %v208 = vld [vmem:[%s181 + $0x20] sm:$0x3]
        %v209 = vld [vmem:[%s181 + $0x22] sm:$0x3]
        %v210 = vld [vmem:[%s181 + $0x24] sm:$0x3]
        %v211 = vld [vmem:[%s181 + $0x26] sm:$0x3]
        %v212 = vld [vmem:[%s181 + $0x28] sm:$0x3]
        %v213 = vld [vmem:[%s181 + $0x2a] sm:$0x3]
        %v214 = vld [vmem:[%s181 + $0x2c] sm:$0x3]
        %v215 = vld [vmem:[%s181 + $0x2e] sm:$0x3]
        %v216 = vld [vmem:[%s181 + $0x30] sm:$0x3]
        %v217 = vld [vmem:[%s181 + $0x32] sm:$0x3]
        %v218 = vld [vmem:[%s181 + $0x34] sm:$0x3]
        %v219 = vld [vmem:[%s181 + $0x36] sm:$0x3]
        %v220 = vld [vmem:[%s181 + $0x38] sm:$0x3]
        %v221 = vld [vmem:[%s181 + $0x3a] sm:$0x3]
        %v222 = vld [vmem:[%s181 + $0x3c] sm:$0x3]
        %v223 = vld [vmem:[%s181 + $0x3e] sm:$0x3]
        %v224 = vunpack.c.0.s8 %v192
        %v225 = vunpack.c.0.s8 %v193
        %v226 = vunpack.c.0.s8 %v194
        %v227 = vunpack.c.0.s8 %v195
        %v228 = vunpack.c.0.s8 %v196
        %v229 = vunpack.c.0.s8 %v197
        %v230 = vunpack.c.0.s8 %v198
        %v231 = vunpack.c.0.s8 %v199
        %v232 = vunpack.c.0.s8 %v200
        %v233 = vunpack.c.0.s8 %v201
        %v234 = vunpack.c.0.s8 %v202
        %v235 = vunpack.c.0.s8 %v203
        %v236 = vunpack.c.0.s8 %v204
        %v237 = vunpack.c.0.s8 %v205
        %v238 = vunpack.c.0.s8 %v206
        %v239 = vunpack.c.0.s8 %v207
        %v240 = vunpack.c.0.s8 %v208
        %v241 = vunpack.c.0.s8 %v209
        %v242 = vunpack.c.0.s8 %v210
        %v243 = vunpack.c.0.s8 %v211
        %v244 = vunpack.c.0.s8 %v212
        %v245 = vunpack.c.0.s8 %v213
        %v246 = vunpack.c.0.s8 %v214
        %v247 = vunpack.c.0.s8 %v215
        %v248 = vunpack.c.0.s8 %v216
        %v249 = vunpack.c.0.s8 %v217
        %v250 = vunpack.c.0.s8 %v218
        %v251 = vunpack.c.0.s8 %v219
        %v252 = vunpack.c.0.s8 %v220
        %v253 = vunpack.c.0.s8 %v221
        %v254 = vunpack.c.0.s8 %v222
        %v255 = vunpack.c.0.s8 %v223
        %v256 = vcvt.s32.f32 %v224
        %v257 = vcvt.s32.f32 %v225
        %v258 = vcvt.s32.f32 %v226
        %v259 = vcvt.s32.f32 %v227
        %v260 = vcvt.s32.f32 %v228
        %v261 = vcvt.s32.f32 %v229
        %v262 = vcvt.s32.f32 %v230
        %v263 = vcvt.s32.f32 %v231
        %v264 = vcvt.s32.f32 %v232
        %v265 = vcvt.s32.f32 %v233
        %v266 = vcvt.s32.f32 %v234
        %v267 = vcvt.s32.f32 %v235
        %v268 = vcvt.s32.f32 %v236
        %v269 = vcvt.s32.f32 %v237
        %v270 = vcvt.s32.f32 %v238
        %v271 = vcvt.s32.f32 %v239
        %v272 = vcvt.s32.f32 %v240
        %v273 = vcvt.s32.f32 %v241
        %v274 = vcvt.s32.f32 %v242
        %v275 = vcvt.s32.f32 %v243
        %v276 = vcvt.s32.f32 %v244
        %v277 = vcvt.s32.f32 %v245
        %v278 = vcvt.s32.f32 %v246
        %v279 = vcvt.s32.f32 %v247
        %v280 = vcvt.s32.f32 %v248
        %v281 = vcvt.s32.f32 %v249
        %v282 = vcvt.s32.f32 %v250
        %v283 = vcvt.s32.f32 %v251
        %v284 = vcvt.s32.f32 %v252
        %v285 = vcvt.s32.f32 %v253
        %v286 = vcvt.s32.f32 %v254
        %v287 = vcvt.s32.f32 %v255
        %v288 = vld [vmem:[%s1] sm:$0xff]
        %v289 = vld [vmem:[%s1 + $0x8] sm:$0xff]
        %v290 = vld [vmem:[%s1 + $0x10] sm:$0xff]
        %v291 = vld [vmem:[%s1 + $0x18] sm:$0xff]
        %v292 = vld [vmem:[%s1 + $0x20] sm:$0xff]
        %v293 = vld [vmem:[%s1 + $0x28] sm:$0xff]
        %v294 = vld [vmem:[%s1 + $0x30] sm:$0xff]
        %v295 = vld [vmem:[%s2] sm:$0x1]
        %v297 = vperm.slane %v295, 0
        %vm299 = vcmask 457728
        %v301 = vsel %vm299, %v256, 0
        %v304 = vsel %vm299, %v257, 0
        %v307 = vsel %vm299, %v258, 0
        %v310 = vsel %vm299, %v259, 0
        %v313 = vsel %vm299, %v260, 0
        %v316 = vsel %vm299, %v261, 0
        %v319 = vsel %vm299, %v262, 0
        %v322 = vsel %vm299, %v263, 0
        %v325 = vsel %vm299, %v264, 0
        %v328 = vsel %vm299, %v265, 0
        %v331 = vsel %vm299, %v266, 0
        %v334 = vsel %vm299, %v267, 0
        %v337 = vsel %vm299, %v268, 0
        %v340 = vsel %vm299, %v269, 0
        %v343 = vsel %vm299, %v270, 0
        %v346 = vsel %vm299, %v271, 0
        %v349 = vsel %vm299, %v272, 0
        %v352 = vsel %vm299, %v273, 0
        %v355 = vsel %vm299, %v274, 0
        %v358 = vsel %vm299, %v275, 0
        %v361 = vsel %vm299, %v276, 0
        %v364 = vsel %vm299, %v277, 0
        %v367 = vsel %vm299, %v278, 0
        %v370 = vsel %vm299, %v279, 0
        %v373 = vsel %vm299, %v280, 0
        %v376 = vsel %vm299, %v281, 0
        %v379 = vsel %vm299, %v282, 0
        %v382 = vsel %vm299, %v283, 0
        %v385 = vsel %vm299, %v284, 0
        %v388 = vsel %vm299, %v285, 0
        %v391 = vsel %vm299, %v286, 0
        %v394 = vsel %vm299, %v287, 0
        %396 = vmatpush.msra.mxu0 0.0
        %397 = vmatpush.msra.mxu0 0.0
        %398 = vmatpush.msra.mxu0 0.0
        %399 = vmatpush.msra.mxu0 0.0
        %400 = vmatpush.msra.mxu0 0.0
        %401 = vmatpush.msra.mxu0 0.0
        %402 = vmatpush.msra.mxu0 0.0
        %403 = vmatpush.msra.mxu0 0.0
        %404 = vmatpush.msra.mxu0 0.0
        %405 = vmatpush.msra.mxu0 %v294
        %406 = vmatpush.msra.mxu0 %v293
        %407 = vmatpush.msra.mxu0 %v292
        %408 = vmatpush.msra.mxu0 %v291
        %409 = vmatpush.msra.mxu0 %v290
        %410 = vmatpush.msra.mxu0 %v289
        %411 = vmatpush.msra.mxu0 %v288
        %412 = vmatmul.f32.gmra.mxu0 %v301
        %v413 = vpop.f32.mrf.mxu0
        %v414 = vadd.f32 %v297, %v413
        %415 = vmatmul.f32.gmra.mxu0 %v304
        %v416 = vpop.f32.mrf.mxu0
        %v417 = vadd.f32 %v297, %v416
        %418 = vmatmul.f32.gmra.mxu0 %v307
        %v419 = vpop.f32.mrf.mxu0
        %v420 = vadd.f32 %v297, %v419
        %421 = vmatmul.f32.gmra.mxu0 %v310
        %v422 = vpop.f32.mrf.mxu0
        %v423 = vadd.f32 %v297, %v422
        %424 = vmatmul.f32.gmra.mxu0 %v313
        %v425 = vpop.f32.mrf.mxu0
        %v426 = vadd.f32 %v297, %v425
        %427 = vmatmul.f32.gmra.mxu0 %v316
        %v428 = vpop.f32.mrf.mxu0
        %v429 = vadd.f32 %v297, %v428
        %430 = vmatmul.f32.gmra.mxu0 %v319
        %v431 = vpop.f32.mrf.mxu0
        %v432 = vadd.f32 %v297, %v431
        %433 = vmatmul.f32.gmra.mxu0 %v322
        %v434 = vpop.f32.mrf.mxu0
        %v435 = vadd.f32 %v297, %v434
        %436 = vmatmul.f32.gmra.mxu0 %v325
        %v437 = vpop.f32.mrf.mxu0
        %v438 = vadd.f32 %v297, %v437
        %439 = vmatmul.f32.gmra.mxu0 %v328
        %v440 = vpop.f32.mrf.mxu0
        %v441 = vadd.f32 %v297, %v440
        %442 = vmatmul.f32.gmra.mxu0 %v331
        %v443 = vpop.f32.mrf.mxu0
        %v444 = vadd.f32 %v297, %v443
        %445 = vmatmul.f32.gmra.mxu0 %v334
        %v446 = vpop.f32.mrf.mxu0
        %v447 = vadd.f32 %v297, %v446
        %448 = vmatmul.f32.gmra.mxu0 %v337
        %v449 = vpop.f32.mrf.mxu0
        %v450 = vadd.f32 %v297, %v449
        %451 = vmatmul.f32.gmra.mxu0 %v340
        %v452 = vpop.f32.mrf.mxu0
        %v453 = vadd.f32 %v297, %v452
        %454 = vmatmul.f32.gmra.mxu0 %v343
        %v455 = vpop.f32.mrf.mxu0
        %v456 = vadd.f32 %v297, %v455
        %457 = vmatmul.f32.gmra.mxu0 %v346
        %v458 = vpop.f32.mrf.mxu0
        %v459 = vadd.f32 %v297, %v458
        %460 = vmatmul.f32.gmra.mxu0 %v349
        %v461 = vpop.f32.mrf.mxu0
        %v462 = vadd.f32 %v297, %v461
        %463 = vmatmul.f32.gmra.mxu0 %v352
        %v464 = vpop.f32.mrf.mxu0
        %v465 = vadd.f32 %v297, %v464
        %466 = vmatmul.f32.gmra.mxu0 %v355
        %v467 = vpop.f32.mrf.mxu0
        %v468 = vadd.f32 %v297, %v467
        %469 = vmatmul.f32.gmra.mxu0 %v358
        %v470 = vpop.f32.mrf.mxu0
        %v471 = vadd.f32 %v297, %v470
        %472 = vmatmul.f32.gmra.mxu0 %v361
        %v473 = vpop.f32.mrf.mxu0
        %v474 = vadd.f32 %v297, %v473
        %475 = vmatmul.f32.gmra.mxu0 %v364
        %v476 = vpop.f32.mrf.mxu0
        %v477 = vadd.f32 %v297, %v476
        %478 = vmatmul.f32.gmra.mxu0 %v367
        %v479 = vpop.f32.mrf.mxu0
        %v480 = vadd.f32 %v297, %v479
        %481 = vmatmul.f32.gmra.mxu0 %v370
        %v482 = vpop.f32.mrf.mxu0
        %v483 = vadd.f32 %v297, %v482
        %484 = vmatmul.f32.gmra.mxu0 %v373
        %v485 = vpop.f32.mrf.mxu0
        %v486 = vadd.f32 %v297, %v485
        %487 = vmatmul.f32.gmra.mxu0 %v376
        %v488 = vpop.f32.mrf.mxu0
        %v489 = vadd.f32 %v297, %v488
        %490 = vmatmul.f32.gmra.mxu0 %v379
        %v491 = vpop.f32.mrf.mxu0
        %v492 = vadd.f32 %v297, %v491
        %493 = vmatmul.f32.gmra.mxu0 %v382
        %v494 = vpop.f32.mrf.mxu0
        %v495 = vadd.f32 %v297, %v494
        %496 = vmatmul.f32.gmra.mxu0 %v385
        %v497 = vpop.f32.mrf.mxu0
        %v498 = vadd.f32 %v297, %v497
        %499 = vmatmul.f32.gmra.mxu0 %v388
        %v500 = vpop.f32.mrf.mxu0
        %v501 = vadd.f32 %v297, %v500
        %502 = vmatmul.f32.gmra.mxu0 %v391
        %v503 = vpop.f32.mrf.mxu0
        %v504 = vadd.f32 %v297, %v503
        %505 = vmatmul.f32.gmra.mxu0 %v394
        %v506 = vpop.f32.mrf.mxu0
        %v507 = vadd.f32 %v297, %v506
        %508 = vdwg.mxu0
        %vm509 = vcmask 261120
        %510 = vst.msk [vmem:[%s172] sm:$0xff] %vm509, %v414
        %511 = vst.msk [vmem:[%s172 + $0x8] sm:$0xff] %vm509, %v417
        %512 = vst.msk [vmem:[%s172 + $0x10] sm:$0xff] %vm509, %v420
        %513 = vst.msk [vmem:[%s172 + $0x18] sm:$0xff] %vm509, %v423
        %514 = vst.msk [vmem:[%s172 + $0x20] sm:$0xff] %vm509, %v426
        %515 = vst.msk [vmem:[%s172 + $0x28] sm:$0xff] %vm509, %v429
        %516 = vst.msk [vmem:[%s172 + $0x30] sm:$0xff] %vm509, %v432
        %517 = vst.msk [vmem:[%s172 + $0x38] sm:$0xff] %vm509, %v435
        %518 = vst.msk [vmem:[%s172 + $0x40] sm:$0xff] %vm509, %v438
        %519 = vst.msk [vmem:[%s172 + $0x48] sm:$0xff] %vm509, %v441
        %520 = vst.msk [vmem:[%s172 + $0x50] sm:$0xff] %vm509, %v444
        %521 = vst.msk [vmem:[%s172 + $0x58] sm:$0xff] %vm509, %v447
        %522 = vst.msk [vmem:[%s172 + $0x60] sm:$0xff] %vm509, %v450
        %523 = vst.msk [vmem:[%s172 + $0x68] sm:$0xff] %vm509, %v453
        %524 = vst.msk [vmem:[%s172 + $0x70] sm:$0xff] %vm509, %v456
        %525 = vst.msk [vmem:[%s172 + $0x78] sm:$0xff] %vm509, %v459
        %526 = vst.msk [vmem:[%s172 + $0x80] sm:$0xff] %vm509, %v462
        %527 = vst.msk [vmem:[%s172 + $0x88] sm:$0xff] %vm509, %v465
        %528 = vst.msk [vmem:[%s172 + $0x90] sm:$0xff] %vm509, %v468
        %529 = vst.msk [vmem:[%s172 + $0x98] sm:$0xff] %vm509, %v471
        %530 = vst.msk [vmem:[%s172 + $0xa0] sm:$0xff] %vm509, %v474
        %531 = vst.msk [vmem:[%s172 + $0xa8] sm:$0xff] %vm509, %v477
        %532 = vst.msk [vmem:[%s172 + $0xb0] sm:$0xff] %vm509, %v480
        %533 = vst.msk [vmem:[%s172 + $0xb8] sm:$0xff] %vm509, %v483
        %534 = vst.msk [vmem:[%s172 + $0xc0] sm:$0xff] %vm509, %v486
        %535 = vst.msk [vmem:[%s172 + $0xc8] sm:$0xff] %vm509, %v489
        %536 = vst.msk [vmem:[%s172 + $0xd0] sm:$0xff] %vm509, %v492
        %537 = vst.msk [vmem:[%s172 + $0xd8] sm:$0xff] %vm509, %v495
        %538 = vst.msk [vmem:[%s172 + $0xe0] sm:$0xff] %vm509, %v498
        %539 = vst.msk [vmem:[%s172 + $0xe8] sm:$0xff] %vm509, %v501
        %540 = vst.msk [vmem:[%s172 + $0xf0] sm:$0xff] %vm509, %v504
        %541 = vst.msk [vmem:[%s172 + $0xf8] sm:$0xff] %vm509, %v507
        %s542 = sand.u32 %s90, 1
        %s543 = sand.u32 %s90, 1
        %s544 = smul.addr %s543, 256
        %s545 = scalar_lea.vmem [#allocation2], %s544
        // Predicated region
        $region33: #{tpu_custom_call.1} parent=31 // pred_check
          %p546 = pneg %p100
        $region34: #{tpu_custom_call.1} parent=31 // pred_check_branch
          %548 = sbr.rel (%p546) target = $region36
        $region35: #{tpu_custom_call.1} parent=31 // pred_region
          %s549 = smul.u32 32, %s14
          %s550 = ssub.s32 38, %s549
          %p551 = scmp.lt.s32.totalorder %s550, 32
          %s552 = scalar_select %p551, %s550, 32
          %s553 = smul.u32 8, %s552
          %p554 = scmp.ne.s32.totalorder 0, %s553
          %s555 = smul.addr %s549, 8
          %s556 = scalar_lea.vmem %s3, %s555
          // Predicated region
          $region37: #{tpu_custom_call.1} parent=35 // pred_check
            %p557 = pneg %p554
          $region38: #{tpu_custom_call.1} parent=35 // pred_check_branch
            %559 = sbr.rel (%p557) target = $region40
          $region39: #{tpu_custom_call.1} parent=35 // pred_region
            // Predicated region
            $region41: #{tpu_custom_call.1} parent=39 // pred_check
              _
            $region42: #{tpu_custom_call.1} parent=39 // pred_check_branch
              %561 = sbr.rel (0) target = $region44
            $region43: #{tpu_custom_call.1} parent=39 // pred_region
              // Predicated region
              $region63: #{tpu_custom_call.1} parent=43 // pred_check
                _
              $region64: #{tpu_custom_call.1} parent=43 // pred_check_branch
                %673 = sbr.rel (0) target = $region66
              $region65: #{tpu_custom_call.1} parent=43 // pred_region
                %s674 = sshrl.u32 %s552, 5
                // While loop
                $region67: #{tpu_custom_call.1} parent=65 // loop_pre_header
                  _
                $region68: #{tpu_custom_call.1} parent=65 // loop_header
                  %s676 = sphi 0, %s678
                  %p677 = scmp.ge.s32.totalorder %s676, %s674
                  %s681 = sphi 0, %s750
                  %s682 = sphi %s545, %s753
                  %s683 = sphi %s556, %s754
                $region69: #{tpu_custom_call.1} parent=65 // loop_header_branch
                  %680 = sbr.rel (%p677) target = $region73
                $region70: #{tpu_custom_call.1} parent=65 // loop_body
                  %v684 = vld [vmem:[%s682] sm:$0xff]
                  %685 = vst [vmem:[%s683] sm:$0xff] %v684
                  %v686 = vld [vmem:[%s682 + $0x8] sm:$0xff]
                  %687 = vst [vmem:[%s683 + $0x8] sm:$0xff] %v686
                  %v688 = vld [vmem:[%s682 + $0x10] sm:$0xff]
                  %689 = vst [vmem:[%s683 + $0x10] sm:$0xff] %v688
                  %v690 = vld [vmem:[%s682 + $0x18] sm:$0xff]
                  %691 = vst [vmem:[%s683 + $0x18] sm:$0xff] %v690
                  %v692 = vld [vmem:[%s682 + $0x20] sm:$0xff]
                  %693 = vst [vmem:[%s683 + $0x20] sm:$0xff] %v692
                  %v694 = vld [vmem:[%s682 + $0x28] sm:$0xff]
                  %695 = vst [vmem:[%s683 + $0x28] sm:$0xff] %v694
                  %v696 = vld [vmem:[%s682 + $0x30] sm:$0xff]
                  %697 = vst [vmem:[%s683 + $0x30] sm:$0xff] %v696
                  %v698 = vld [vmem:[%s682 + $0x38] sm:$0xff]
                  %699 = vst [vmem:[%s683 + $0x38] sm:$0xff] %v698
                  %v700 = vld [vmem:[%s682 + $0x40] sm:$0xff]
                  %701 = vst [vmem:[%s683 + $0x40] sm:$0xff] %v700
                  %v702 = vld [vmem:[%s682 + $0x48] sm:$0xff]
                  %703 = vst [vmem:[%s683 + $0x48] sm:$0xff] %v702
                  %v704 = vld [vmem:[%s682 + $0x50] sm:$0xff]
                  %705 = vst [vmem:[%s683 + $0x50] sm:$0xff] %v704
                  %v706 = vld [vmem:[%s682 + $0x58] sm:$0xff]
                  %707 = vst [vmem:[%s683 + $0x58] sm:$0xff] %v706
                  %v708 = vld [vmem:[%s682 + $0x60] sm:$0xff]
                  %709 = vst [vmem:[%s683 + $0x60] sm:$0xff] %v708
                  %v710 = vld [vmem:[%s682 + $0x68] sm:$0xff]
                  %711 = vst [vmem:[%s683 + $0x68] sm:$0xff] %v710
                  %v712 = vld [vmem:[%s682 + $0x70] sm:$0xff]
                  %713 = vst [vmem:[%s683 + $0x70] sm:$0xff] %v712
                  %v714 = vld [vmem:[%s682 + $0x78] sm:$0xff]
                  %715 = vst [vmem:[%s683 + $0x78] sm:$0xff] %v714
                  %v716 = vld [vmem:[%s682 + $0x80] sm:$0xff]
                  %717 = vst [vmem:[%s683 + $0x80] sm:$0xff] %v716
                  %v718 = vld [vmem:[%s682 + $0x88] sm:$0xff]
                  %719 = vst [vmem:[%s683 + $0x88] sm:$0xff] %v718
                  %v720 = vld [vmem:[%s682 + $0x90] sm:$0xff]
                  %721 = vst [vmem:[%s683 + $0x90] sm:$0xff] %v720
                  %v722 = vld [vmem:[%s682 + $0x98] sm:$0xff]
                  %723 = vst [vmem:[%s683 + $0x98] sm:$0xff] %v722
                  %v724 = vld [vmem:[%s682 + $0xa0] sm:$0xff]
                  %725 = vst [vmem:[%s683 + $0xa0] sm:$0xff] %v724
                  %v726 = vld [vmem:[%s682 + $0xa8] sm:$0xff]
                  %727 = vst [vmem:[%s683 + $0xa8] sm:$0xff] %v726
                  %v728 = vld [vmem:[%s682 + $0xb0] sm:$0xff]
                  %729 = vst [vmem:[%s683 + $0xb0] sm:$0xff] %v728
                  %v730 = vld [vmem:[%s682 + $0xb8] sm:$0xff]
                  %731 = vst [vmem:[%s683 + $0xb8] sm:$0xff] %v730
                  %v732 = vld [vmem:[%s682 + $0xc0] sm:$0xff]
                  %733 = vst [vmem:[%s683 + $0xc0] sm:$0xff] %v732
                  %v734 = vld [vmem:[%s682 + $0xc8] sm:$0xff]
                  %735 = vst [vmem:[%s683 + $0xc8] sm:$0xff] %v734
                  %v736 = vld [vmem:[%s682 + $0xd0] sm:$0xff]
                  %737 = vst [vmem:[%s683 + $0xd0] sm:$0xff] %v736
                  %v738 = vld [vmem:[%s682 + $0xd8] sm:$0xff]
                  %739 = vst [vmem:[%s683 + $0xd8] sm:$0xff] %v738
                  %v740 = vld [vmem:[%s682 + $0xe0] sm:$0xff]
                  %741 = vst [vmem:[%s683 + $0xe0] sm:$0xff] %v740
                  %v742 = vld [vmem:[%s682 + $0xe8] sm:$0xff]
                  %743 = vst [vmem:[%s683 + $0xe8] sm:$0xff] %v742
                  %v744 = vld [vmem:[%s682 + $0xf0] sm:$0xff]
                  %745 = vst [vmem:[%s683 + $0xf0] sm:$0xff] %v744
                  %v746 = vld [vmem:[%s682 + $0xf8] sm:$0xff]
                  %747 = vst [vmem:[%s683 + $0xf8] sm:$0xff] %v746
                  %s748 = sadd.s32 1, %s681
                  %p749 = scmp.ge.s32.totalorder %s748, %s674
                  %s750 = scalar_select %p749, 0, %s748
                  %s751 = smul.u32 %s750, 256
                  %s752 = smul.u32 %s750, 256
                  %s753 = scalar_lea.vmem %s545, %s751 [#allocation2]
                  %s754 = scalar_lea.vmem %s556, %s752
                $region71: #{tpu_custom_call.1} parent=65 // loop_footer
                  %s678 = sadd.s32 %s676, 1
                $region72: #{tpu_custom_call.1} parent=65 // loop_footer_branch
                  %675 = sbr.rel target = $region68
                $region73: #{tpu_custom_call.1} parent=65 // loop_exit
                  _
                %s755 = sshrl.u32 %s552, 5
                %s756 = sand.u32 %s552, 31
                %s757 = smul.u32 %s755, 32
                %s758 = smul.u32 8, %s757
                %s759 = scalar_lea.vmem %s545, %s758 [#allocation2]
                %s760 = smul.u32 8, %s757
                %s761 = scalar_lea.vmem %s556, %s760
                // While loop
                $region74: #{tpu_custom_call.1} parent=65 // loop_pre_header
                  _
                $region75: #{tpu_custom_call.1} parent=65 // loop_header
                  %s763 = sphi 0, %s765
                  %p764 = scmp.ge.s32.totalorder %s763, %s756
                  %s768 = sphi 0, %s775
                  %s769 = sphi %s759, %s778
                  %s770 = sphi %s761, %s779
                $region76: #{tpu_custom_call.1} parent=65 // loop_header_branch
                  %767 = sbr.rel (%p764) target = $region80
                $region77: #{tpu_custom_call.1} parent=65 // loop_body
                  %v771 = vld [vmem:[%s769] sm:$0xff]
                  %772 = vst [vmem:[%s770] sm:$0xff] %v771
                  %s773 = sadd.s32 1, %s768
                  %p774 = scmp.ge.s32.totalorder %s773, %s756
                  %s775 = scalar_select %p774, 0, %s773
                  %s776 = smul.u32 %s775, 8
                  %s777 = smul.u32 %s775, 8
                  %s778 = scalar_lea.vmem %s759, %s776 [#allocation2]
                  %s779 = scalar_lea.vmem %s761, %s777
                $region78: #{tpu_custom_call.1} parent=65 // loop_footer
                  %s765 = sadd.s32 %s763, 1
                $region79: #{tpu_custom_call.1} parent=65 // loop_footer_branch
                  %762 = sbr.rel target = $region75
                $region80: #{tpu_custom_call.1} parent=65 // loop_exit
                  _
              $region66: #{tpu_custom_call.1} parent=43 // pred_fallthru
                _
              // Predicated region
              $region81: #{tpu_custom_call.1} parent=43 // pred_check
                _
              $region82: #{tpu_custom_call.1} parent=43 // pred_check_branch
                %781 = sbr.rel target = $region84
              $region83: #{tpu_custom_call.1} parent=43 // pred_region
                _
              $region84: #{tpu_custom_call.1} parent=43 // pred_fallthru
                _
            $region44: #{tpu_custom_call.1} parent=39 // pred_fallthru
              _
            // Predicated region
            $region45: #{tpu_custom_call.1} parent=39 // pred_check
              _
            $region46: #{tpu_custom_call.1} parent=39 // pred_check_branch
              %563 = sbr.rel target = $region48
            $region47: #{tpu_custom_call.1} parent=39 // pred_region
              %s565 = ssub.s32 256, 1
              %s566 = sshrl.u32 %s552, 5
              // While loop
              $region49: #{tpu_custom_call.1} parent=47 // loop_pre_header
                _
              $region50: #{tpu_custom_call.1} parent=47 // loop_header
                %s568 = sphi 0, %s570
                %p569 = scmp.ge.s32.totalorder %s568, %s566
                %s573 = sphi 0, %s642
                %s574 = sphi %s545, %s645
                %s575 = sphi %s556, %s646
              $region51: #{tpu_custom_call.1} parent=47 // loop_header_branch
                %572 = sbr.rel (%p569) target = $region55
              $region52: #{tpu_custom_call.1} parent=47 // loop_body
                %v576 = vld [vmem:[%s574] sm:%s565]
                %577 = vst [vmem:[%s575] sm:%s565] %v576
                %v578 = vld [vmem:[%s574 + $0x8] sm:%s565]
                %579 = vst [vmem:[%s575 + $0x8] sm:%s565] %v578
                %v580 = vld [vmem:[%s574 + $0x10] sm:%s565]
                %581 = vst [vmem:[%s575 + $0x10] sm:%s565] %v580
                %v582 = vld [vmem:[%s574 + $0x18] sm:%s565]
                %583 = vst [vmem:[%s575 + $0x18] sm:%s565] %v582
                %v584 = vld [vmem:[%s574 + $0x20] sm:%s565]
                %585 = vst [vmem:[%s575 + $0x20] sm:%s565] %v584
                %v586 = vld [vmem:[%s574 + $0x28] sm:%s565]
                %587 = vst [vmem:[%s575 + $0x28] sm:%s565] %v586
                %v588 = vld [vmem:[%s574 + $0x30] sm:%s565]
                %589 = vst [vmem:[%s575 + $0x30] sm:%s565] %v588
                %v590 = vld [vmem:[%s574 + $0x38] sm:%s565]
                %591 = vst [vmem:[%s575 + $0x38] sm:%s565] %v590
                %v592 = vld [vmem:[%s574 + $0x40] sm:%s565]
                %593 = vst [vmem:[%s575 + $0x40] sm:%s565] %v592
                %v594 = vld [vmem:[%s574 + $0x48] sm:%s565]
                %595 = vst [vmem:[%s575 + $0x48] sm:%s565] %v594
                %v596 = vld [vmem:[%s574 + $0x50] sm:%s565]
                %597 = vst [vmem:[%s575 + $0x50] sm:%s565] %v596
                %v598 = vld [vmem:[%s574 + $0x58] sm:%s565]
                %599 = vst [vmem:[%s575 + $0x58] sm:%s565] %v598
                %v600 = vld [vmem:[%s574 + $0x60] sm:%s565]
                %601 = vst [vmem:[%s575 + $0x60] sm:%s565] %v600
                %v602 = vld [vmem:[%s574 + $0x68] sm:%s565]
                %603 = vst [vmem:[%s575 + $0x68] sm:%s565] %v602
                %v604 = vld [vmem:[%s574 + $0x70] sm:%s565]
                %605 = vst [vmem:[%s575 + $0x70] sm:%s565] %v604
                %v606 = vld [vmem:[%s574 + $0x78] sm:%s565]
                %607 = vst [vmem:[%s575 + $0x78] sm:%s565] %v606
                %v608 = vld [vmem:[%s574 + $0x80] sm:%s565]
                %609 = vst [vmem:[%s575 + $0x80] sm:%s565] %v608
                %v610 = vld [vmem:[%s574 + $0x88] sm:%s565]
                %611 = vst [vmem:[%s575 + $0x88] sm:%s565] %v610
                %v612 = vld [vmem:[%s574 + $0x90] sm:%s565]
                %613 = vst [vmem:[%s575 + $0x90] sm:%s565] %v612
                %v614 = vld [vmem:[%s574 + $0x98] sm:%s565]
                %615 = vst [vmem:[%s575 + $0x98] sm:%s565] %v614
                %v616 = vld [vmem:[%s574 + $0xa0] sm:%s565]
                %617 = vst [vmem:[%s575 + $0xa0] sm:%s565] %v616
                %v618 = vld [vmem:[%s574 + $0xa8] sm:%s565]
                %619 = vst [vmem:[%s575 + $0xa8] sm:%s565] %v618
                %v620 = vld [vmem:[%s574 + $0xb0] sm:%s565]
                %621 = vst [vmem:[%s575 + $0xb0] sm:%s565] %v620
                %v622 = vld [vmem:[%s574 + $0xb8] sm:%s565]
                %623 = vst [vmem:[%s575 + $0xb8] sm:%s565] %v622
                %v624 = vld [vmem:[%s574 + $0xc0] sm:%s565]
                %625 = vst [vmem:[%s575 + $0xc0] sm:%s565] %v624
                %v626 = vld [vmem:[%s574 + $0xc8] sm:%s565]
                %627 = vst [vmem:[%s575 + $0xc8] sm:%s565] %v626
                %v628 = vld [vmem:[%s574 + $0xd0] sm:%s565]
                %629 = vst [vmem:[%s575 + $0xd0] sm:%s565] %v628
                %v630 = vld [vmem:[%s574 + $0xd8] sm:%s565]
                %631 = vst [vmem:[%s575 + $0xd8] sm:%s565] %v630
                %v632 = vld [vmem:[%s574 + $0xe0] sm:%s565]
                %633 = vst [vmem:[%s575 + $0xe0] sm:%s565] %v632
                %v634 = vld [vmem:[%s574 + $0xe8] sm:%s565]
                %635 = vst [vmem:[%s575 + $0xe8] sm:%s565] %v634
                %v636 = vld [vmem:[%s574 + $0xf0] sm:%s565]
                %637 = vst [vmem:[%s575 + $0xf0] sm:%s565] %v636
                %v638 = vld [vmem:[%s574 + $0xf8] sm:%s565]
                %639 = vst [vmem:[%s575 + $0xf8] sm:%s565] %v638
                %s640 = sadd.s32 1, %s573
                %p641 = scmp.ge.s32.totalorder %s640, %s566
                %s642 = scalar_select %p641, 0, %s640
                %s643 = smul.u32 %s642, 256
                %s644 = smul.u32 %s642, 256
                %s645 = scalar_lea.vmem %s545, %s643 [#allocation2]
                %s646 = scalar_lea.vmem %s556, %s644
              $region53: #{tpu_custom_call.1} parent=47 // loop_footer
                %s570 = sadd.s32 %s568, 1
              $region54: #{tpu_custom_call.1} parent=47 // loop_footer_branch
                %567 = sbr.rel target = $region50
              $region55: #{tpu_custom_call.1} parent=47 // loop_exit
                _
              %s647 = sshrl.u32 %s552, 5
              %s648 = sand.u32 %s552, 31
              %s649 = smul.u32 %s647, 32
              %s650 = smul.u32 8, %s649
              %s651 = scalar_lea.vmem %s545, %s650 [#allocation2]
              %s652 = smul.u32 8, %s649
              %s653 = scalar_lea.vmem %s556, %s652
              // While loop
              $region56: #{tpu_custom_call.1} parent=47 // loop_pre_header
                _
              $region57: #{tpu_custom_call.1} parent=47 // loop_header
                %s655 = sphi 0, %s657
                %p656 = scmp.ge.s32.totalorder %s655, %s648
                %s660 = sphi 0, %s667
                %s661 = sphi %s651, %s670
                %s662 = sphi %s653, %s671
              $region58: #{tpu_custom_call.1} parent=47 // loop_header_branch
                %659 = sbr.rel (%p656) target = $region62
              $region59: #{tpu_custom_call.1} parent=47 // loop_body
                %v663 = vld [vmem:[%s661] sm:%s565]
                %664 = vst [vmem:[%s662] sm:%s565] %v663
                %s665 = sadd.s32 1, %s660
                %p666 = scmp.ge.s32.totalorder %s665, %s648
                %s667 = scalar_select %p666, 0, %s665
                %s668 = smul.u32 %s667, 8
                %s669 = smul.u32 %s667, 8
                %s670 = scalar_lea.vmem %s651, %s668 [#allocation2]
                %s671 = scalar_lea.vmem %s653, %s669
              $region60: #{tpu_custom_call.1} parent=47 // loop_footer
                %s657 = sadd.s32 %s655, 1
              $region61: #{tpu_custom_call.1} parent=47 // loop_footer_branch
                %654 = sbr.rel target = $region57
              $region62: #{tpu_custom_call.1} parent=47 // loop_exit
                _
            $region48: #{tpu_custom_call.1} parent=39 // pred_fallthru
              _
          $region40: #{tpu_custom_call.1} parent=35 // pred_fallthru
            _
          %782 = vnop
        $region36: #{tpu_custom_call.1} parent=31 // pred_fallthru
          _
      $region32: #{tpu_custom_call.1} parent=5 // pred_fallthru
        _
      %p783 = scmp.le.s32.totalorder 2, %s9
      // Predicated region
      $region85: #{tpu_custom_call.1} parent=5 // pred_check
        %p784 = pneg %p783
      $region86: #{tpu_custom_call.1} parent=5 // pred_check_branch
        %786 = sbr.rel (%p784) target = $region88
      $region87: #{tpu_custom_call.1} parent=5 // pred_region
        %s787 = ssub.s32 %s9, 2
        // Predicated region
        $region89: #{tpu_custom_call.1} parent=87 // pred_check
          %p788 = pneg %p106
        $region90: #{tpu_custom_call.1} parent=87 // pred_check_branch
          %790 = sbr.rel (%p788) target = $region92
        $region91: #{tpu_custom_call.1} parent=87 // pred_region
          %s791 = sand.u32 %s91, 1
          %s792 = sand.u32 %s91, 1
          %s793 = smul.addr %s792, 256
          %s794 = scalar_lea.vmem [#allocation2], %s793
        $region92: #{tpu_custom_call.1} parent=87 // pred_fallthru
          _
      $region88: #{tpu_custom_call.1} parent=5 // pred_fallthru
        _
    $region6: #{tpu_custom_call.1} parent=1 // loop_footer
      %s13 = sadd.s32 1, %s9
    $region7: #{tpu_custom_call.1} parent=1 // loop_footer_branch
      %8 = sbr.rel target = $region3
    $region8: #{tpu_custom_call.1} parent=1 // loop_exit
      _

</llo_original>
